<compile_context>
chip_gen: v6e
topology: v6e:2x2x1
jax: 0.10.0
libtpu: 0.0.40
codegen_flags: <defaults>
</compile_context>

<pallas_src>
import jax
import jax.numpy as jnp
from jax import lax
from jax.experimental import pallas as pl
from jax.experimental.pallas import tpu as pltpu


def bimap_kernel(x_ref, wn_ref, w2_ref, o_ref):
    """One grid step (= one batch element b).

    x_ref : (1, hi, ni, ni)   X[b], all input channels
    wn_ref: (hi, ni, ho*no)   W transposed/flattened for stage 1 (VMEM-resident)
    w2_ref: (ho, hi*ni, no)   W flattened per output channel for stage 2 (resident)
    o_ref : (1, ho, no, no)   P[b], all output channels
    """
    x = x_ref[0]                       # (hi, ni, ni)
    wn = wn_ref[...]                   # (hi, ni, ho*no)
    w2 = w2_ref[...]                   # (ho, hi*ni, no)
    hi, ni, hono = wn.shape
    ho, _, no = w2.shape

    # Stage 1: one batched MXU call over hi:  Y[i] = X[b,i] @ W_n[i].
    y = lax.dot_general(
        x, wn,
        dimension_numbers=(((2,), (1,)), ((0,), (0,))),
        preferred_element_type=jnp.float32)          # (hi, ni, ho*no)

    # Collapse hi into the stage-2 contraction (sublane relabel only: ni % 8 == 0).
    y2 = y.reshape(hi * ni, hono)                    # (hi*ni, ho*no)

    # Stage 2: per output channel co, contract K = hi*ni.  Unrolled Python loop
    # (ho is small and static); no .T anywhere (contract axis 0 of both sides).
    outs = []
    for co in range(ho):
        p = lax.dot_general(
            w2[co],                                  # (hi*ni, no)
            y2[:, co * no:(co + 1) * no],            # (hi*ni, no) static lane slice
            dimension_numbers=(((0,), (0,)), ((), ())),
            preferred_element_type=jnp.float32)      # (no, no)
        outs.append(p)

    # Single slab store for all output channels of this batch element.
    o_ref[0] = jnp.stack(outs, axis=0).astype(o_ref.dtype)


def bimap_channels(X, W):
    """P[b, co] = sum_ci W[co,ci]^T @ X[b,ci] @ W[co,ci]."""
    B, hi, ni, ni2 = X.shape
    ho, hi_w, ni_w, no = W.shape
    assert hi == hi_w and ni == ni_w and ni == ni2

    # Wrapper-side reshapes/transposes of W are free layout plumbing; doing them
    # here removes per-step in-kernel relayouts from the ld/st + XLU slots.
    W_n = jnp.transpose(W, (1, 2, 0, 3)).reshape(hi, ni, ho * no)   # stage-1 RHS
    W_2 = W.reshape(ho, hi * ni, no)                                # stage-2 LHS

    itemsize = jnp.dtype(X.dtype).itemsize
    block_elems = (hi * ni * ni) + (hi * ni * ho * no) + (ho * hi * ni * no) + (ho * no * no)
    # double-buffered blocks + headroom, clamped below v7x's 64 MiB physical VMEM
    vmem_limit = int(min(max(4 * block_elems * itemsize + (1 << 20), 4 << 20), 48 << 20))

    flops = 2 * B * hi * ni * ni * ho * no + 2 * B * ho * hi * ni * no * no
    bytes_accessed = (X.size + 2 * W.size + B * ho * no * no) * itemsize

    return pl.pallas_call(
        bimap_kernel,
        out_shape=jax.ShapeDtypeStruct((B, ho, no, no), X.dtype),
        grid=(B,),
        in_specs=[
            # X: one slab per batch element (all hi channels).
            pl.BlockSpec((1, hi, ni, ni), lambda b: (b, 0, 0, 0)),
            # W views: constant block index => DMA'd once, resident in VMEM.
            # TODO(synk): at production W sizes single-buffer these
            # (pipeline_mode=pl.Buffered(1)) or slice W per output channel.
            pl.BlockSpec((hi, ni, ho * no), lambda b: (0, 0, 0)),
            pl.BlockSpec((ho, hi * ni, no), lambda b: (0, 0, 0)),
        ],
        out_specs=pl.BlockSpec((1, ho, no, no), lambda b: (b, 0, 0, 0)),
        compiler_params=pltpu.CompilerParams(
            dimension_semantics=("parallel",),   # v7x: the 2 TCs shard over batches
            vmem_limit_bytes=vmem_limit,
        ),
        cost_estimate=pl.CostEstimate(
            flops=int(flops), transcendentals=0, bytes_accessed=int(bytes_accessed)),
    )(X, W_n, W_2)


def init_bimap_parameter(key, ho, hi, ni, no, dtype=jnp.float32):
    """Deterministic Stiefel init: per (ho,hi), ni x no matrix with orthonormal cols."""
    a = jax.random.normal(key, (ho, hi, ni, ni), dtype=jnp.float32)
    q, _ = jnp.linalg.qr(a)            # (ho, hi, ni, ni), orthonormal columns
    return q[..., :no].astype(dtype)   # (ho, hi, ni, no)


def make_spd_batch(key, B, hi, ni, dtype=jnp.float32):
    """Deterministic batch of SPD matrices: A A^T + eps I."""
    a = jax.random.normal(key, (B, hi, ni, ni), dtype=jnp.float32)
    spd = jnp.einsum("bcij,bckj->bcik", a, a) + 1e-3 * jnp.eye(ni, dtype=jnp.float32)
    return spd.astype(dtype)


def bimap_channels_ref(X, W):
    """Pure-JAX reference: P[b,o] = sum_i W[o,i]^T X[b,i] W[o,i]."""
    return jnp.einsum("oinp,binm,oimq->bopq", W, X, W)


if __name__ == "__main__":
    # Small shapes consistent with the module: ho=3, hi=4, ni=16, no=8, batch=2
    B, ho, hi, ni, no = 2, 3, 4, 16, 8

    key = jax.random.PRNGKey(0)
    kx, kw = jax.random.split(key)

    X = make_spd_batch(kx, B, hi, ni)                # (B, hi, ni, ni) float32
    W = init_bimap_parameter(kw, ho, hi, ni, no)     # (ho, hi, ni, no) float32

    P = bimap_channels(X, W)
    P = jax.block_until_ready(P)

    P_ref = bimap_channels_ref(X, W)
    assert P.shape == (B, ho, no, no), P.shape
    err = float(jnp.max(jnp.abs(P - P_ref)))
    tol = 1e-4 * (float(jnp.max(jnp.abs(P_ref))) + 1.0)   # f32 accumulation, K=hi*ni
    assert err < tol, f"max abs error {err} (tol {tol})"

    print("KERNEL_OK")
</pallas_src>

<mosaic_0001>
module attributes {stable_mosaic.version = 11 : i64} {
  func.func @bimap_kernel(%arg0: i32, %arg1: memref<1x4x16x16xf32, #tpu.memory_space<vmem>>, %arg2: memref<4x16x24xf32, #tpu.memory_space<vmem>>, %arg3: memref<3x64x8xf32, #tpu.memory_space<vmem>>, %arg4: memref<1x3x8x8xf32, #tpu.memory_space<vmem>>) attributes {dimension_semantics = [#tpu.dimension_semantics<parallel>], iteration_bounds = array<i64: 2>, scalar_prefetch = 0 : i64, scratch_operands = 0 : i64, tpu.core_type = #tpu.core_type<tc>, window_params = [{transform_indices = @transform_0, window_bounds = array<i64: 1, 4, 16, 16>}, {pipeline_mode = #tpu.pipeline_mode<synchronous>, transform_indices = @transform_1, window_bounds = array<i64: 4, 16, 24>}, {pipeline_mode = #tpu.pipeline_mode<synchronous>, transform_indices = @transform_2, window_bounds = array<i64: 3, 64, 8>}, {transform_indices = @transform_3, window_bounds = array<i64: 1, 3, 8, 8>}]} {
    %c0 = arith.constant 0 : index
    %c0_0 = arith.constant 0 : index
    %c0_1 = arith.constant 0 : index
    %c0_2 = arith.constant 0 : index
    %0 = vector.load %arg1[%c0, %c0_0, %c0_1, %c0_2] : memref<1x4x16x16xf32, #tpu.memory_space<vmem>>, vector<1x4x16x16xf32>
    %1 = vector.shape_cast %0 : vector<1x4x16x16xf32> to vector<4x16x16xf32>
    %c0_3 = arith.constant 0 : index
    %c0_4 = arith.constant 0 : index
    %c0_5 = arith.constant 0 : index
    %2 = vector.load %arg2[%c0_3, %c0_4, %c0_5] : memref<4x16x24xf32, #tpu.memory_space<vmem>>, vector<4x16x24xf32>
    %c0_6 = arith.constant 0 : index
    %c0_7 = arith.constant 0 : index
    %c0_8 = arith.constant 0 : index
    %3 = vector.load %arg3[%c0_6, %c0_7, %c0_8] : memref<3x64x8xf32, #tpu.memory_space<vmem>>, vector<3x64x8xf32>
    %cst = arith.constant dense<0.000000e+00> : vector<4x16x24xf32>
    %4 = tpu.matmul %1, %2, %cst {dimension_numbers = #tpu.dot_dimension_numbers<[2], [1], [1], [2], [0, 0, 0, 1, 1, 2], [0], [0]>} : vector<4x16x16xf32>, vector<4x16x24xf32>, vector<4x16x24xf32> -> vector<4x16x24xf32>
    %5 = vector.shape_cast %4 : vector<4x16x24xf32> to vector<64x24xf32>
    %6 = vector.extract_strided_slice %3 {offsets = [0, 0, 0], sizes = [1, 64, 8], strides = [1, 1, 1]} : vector<3x64x8xf32> to vector<1x64x8xf32>
    %7 = vector.shape_cast %6 : vector<1x64x8xf32> to vector<64x8xf32>
    %8 = vector.extract_strided_slice %5 {offsets = [0, 0], sizes = [64, 8], strides = [1, 1]} : vector<64x24xf32> to vector<64x8xf32>
    %cst_9 = arith.constant dense<0.000000e+00> : vector<8x8xf32>
    %9 = tpu.matmul %7, %8, %cst_9 {dimension_numbers = #tpu.dot_dimension_numbers<[0], [0], [1], [1], [0, 1, 1, 1], [], []>} : vector<64x8xf32>, vector<64x8xf32>, vector<8x8xf32> -> vector<8x8xf32>
    %10 = vector.extract_strided_slice %3 {offsets = [1, 0, 0], sizes = [1, 64, 8], strides = [1, 1, 1]} : vector<3x64x8xf32> to vector<1x64x8xf32>
    %11 = vector.shape_cast %10 : vector<1x64x8xf32> to vector<64x8xf32>
    %12 = vector.extract_strided_slice %5 {offsets = [0, 8], sizes = [64, 8], strides = [1, 1]} : vector<64x24xf32> to vector<64x8xf32>
    %cst_10 = arith.constant dense<0.000000e+00> : vector<8x8xf32>
    %13 = tpu.matmul %11, %12, %cst_10 {dimension_numbers = #tpu.dot_dimension_numbers<[0], [0], [1], [1], [0, 1, 1, 1], [], []>} : vector<64x8xf32>, vector<64x8xf32>, vector<8x8xf32> -> vector<8x8xf32>
    %14 = vector.extract_strided_slice %3 {offsets = [2, 0, 0], sizes = [1, 64, 8], strides = [1, 1, 1]} : vector<3x64x8xf32> to vector<1x64x8xf32>
    %15 = vector.shape_cast %14 : vector<1x64x8xf32> to vector<64x8xf32>
    %16 = vector.extract_strided_slice %5 {offsets = [0, 16], sizes = [64, 8], strides = [1, 1]} : vector<64x24xf32> to vector<64x8xf32>
    %cst_11 = arith.constant dense<0.000000e+00> : vector<8x8xf32>
    %17 = tpu.matmul %15, %16, %cst_11 {dimension_numbers = #tpu.dot_dimension_numbers<[0], [0], [1], [1], [0, 1, 1, 1], [], []>} : vector<64x8xf32>, vector<64x8xf32>, vector<8x8xf32> -> vector<8x8xf32>
    %18 = vector.shape_cast %9 : vector<8x8xf32> to vector<1x8x8xf32>
    %19 = vector.shape_cast %13 : vector<8x8xf32> to vector<1x8x8xf32>
    %20 = vector.shape_cast %17 : vector<8x8xf32> to vector<1x8x8xf32>
    %21 = tpu.concatenate %18, %19, %20 in 0 : vector<1x8x8xf32>, vector<1x8x8xf32>, vector<1x8x8xf32> -> vector<3x8x8xf32>
    %c0_12 = arith.constant 0 : index
    %c0_13 = arith.constant 0 : index
    %c0_14 = arith.constant 0 : index
    %c0_15 = arith.constant 0 : index
    %22 = vector.load %arg4[%c0_12, %c0_13, %c0_14, %c0_15] : memref<1x3x8x8xf32, #tpu.memory_space<vmem>>, vector<1x3x8x8xf32>
    %23 = vector.shape_cast %22 : vector<1x3x8x8xf32> to vector<3x8x8xf32>
    %24 = vector.shape_cast %21 : vector<3x8x8xf32> to vector<1x3x8x8xf32>
    tpu.vector_store %arg4[%c0_12, %c0_13, %c0_14, %c0_15], %24 {strides = array<i32>} : memref<1x3x8x8xf32, #tpu.memory_space<vmem>>, vector<1x3x8x8xf32>,
    return
  }
  func.func @transform_0(%arg0: i32) -> (i32, i32, i32, i32) {
    %c0_i32 = arith.constant 0 : i32
    %c0_i32_0 = arith.constant 0 : i32
    %c0_i32_1 = arith.constant 0 : i32
    %c0_i32_2 = arith.constant 0 : i32
    return %arg0, %c0_i32, %c0_i32_0, %c0_i32_1 : i32, i32, i32, i32
  }
  func.func @transform_1(%arg0: i32) -> (i32, i32, i32) {
    %c0_i32 = arith.constant 0 : i32
    %c0_i32_0 = arith.constant 0 : i32
    %c0_i32_1 = arith.constant 0 : i32
    %c0_i32_2 = arith.constant 0 : i32
    return %c0_i32, %c0_i32_0, %c0_i32_1 : i32, i32, i32
  }
  func.func @transform_2(%arg0: i32) -> (i32, i32, i32) {
    %c0_i32 = arith.constant 0 : i32
    %c0_i32_0 = arith.constant 0 : i32
    %c0_i32_1 = arith.constant 0 : i32
    %c0_i32_2 = arith.constant 0 : i32
    return %c0_i32, %c0_i32_0, %c0_i32_1 : i32, i32, i32
  }
  func.func @transform_3(%arg0: i32) -> (i32, i32, i32, i32) {
    %c0_i32 = arith.constant 0 : i32
    %c0_i32_0 = arith.constant 0 : i32
    %c0_i32_1 = arith.constant 0 : i32
    %c0_i32_2 = arith.constant 0 : i32
    return %arg0, %c0_i32, %c0_i32_0, %c0_i32_1 : i32, i32, i32, i32
  }
}

</mosaic_0001>

<llo_original>
// kernel: tpu_custom_call.1
$region0: #{tpu_custom_call.1}
  #allocation0 [shape = 'u32[]', space=smem, size = 0x4, offset = 0x4, fixed_abs, tag = 'smem constant byte address 0x4 - core index']
  #allocation1 [shape = 'u32[144,128]{1,0:T(1,128)}', space=vmem, size = 0x12000, scoped, tag = 'internal scratch']
  %s0 = inlined_call_operand.vmem [shape: f32[2,4,16,16], index: 0, kind: input, shape index: {}]
  %s1 = inlined_call_operand.vmem [shape: f32[4,16,24], index: 1, kind: input, shape index: {}]
  %s2 = inlined_call_operand.vmem [shape: f32[3,64,8], index: 2, kind: input, shape index: {}]
  %s3 = inlined_call_operand.hbm [shape: f32[2,3,8,8], index: 3, kind: output, shape index: {}]
  %s4 = sld [smem:[#allocation0]]
  $region45: #{tpu_custom_call.1} parent=0
    _
  %s6 = ssub.s32 1, %s4
  %s7 = scalar_select 0, %s6, %s4
  $region1: #{tpu_custom_call.1} parent=0
    #allocation2 [shape = 'u8[24576]{0}', space=vmem, size = 0x6000, scoped, tag = 'output window, operand 0']
    #allocation3 [shape = 's32[2]{0}', space=sflag, size = 0x8, scoped, tag = 'scoped memory for tpu_custom_call.1']
    %8 = vsyncpa [#allocation3], 0
    %s9 = scalar_lea.sflag [#allocation3], 1
    %10 = vsyncpa %s9, 0
    loop: start=0, step=1, limit=4
    $region2: #{tpu_custom_call.1} parent=1 // loop_pre_header
      _
    $region3: #{tpu_custom_call.1} parent=1 // loop_header
      %s12 = sphi 0, %s16
      %p13 = scmp.ge.s32.totalorder %s12, 4
      %s22 = sphi 0, %s24
      %s25 = sphi 0, %s22
      %s26 = sphi 0, %s25
      %s42 = sphi 0, %s26
      %s46 = sphi 0, %s46
      %s48 = sphi 0, %s46
      %s49 = sphi 0, %s48
      %s63 = sphi 0, %s49
      %s67 = sphi 0, %s67
      %s69 = sphi 0, %s67
      %s70 = sphi 0, %s69
      %s84 = sphi 0, %s70
      %s90 = sphi 0, %s92
      %s93 = sphi 0, %s90
      %s94 = sphi 0, %s93
      %s110 = sphi 0, %s94
    $region4: #{tpu_custom_call.1} parent=1 // loop_header_branch
      %15 = sbr.rel (%p13) target = $region8
    $region5: #{tpu_custom_call.1} parent=1 // loop_body
      %s17 = ssub.s32 %s12, 1
      %s18 = ssub.s32 %s12, 2
      %s19 = sadd.s32 %s12, 1
      %s20 = ssub.s32 %s12, %s19
      %p21 = scmp.eq.s32.totalorder %s20, 0
      %s23 = sadd.s32 %s22, 1
      %s24 = scalar_select %p21, %s22, %s23
      %p27 = pneg %p21
      %p28 = scmp.eq.s32.totalorder %s12, 1
      %p29 = por %p27, %p28
      %p30 = scmp.ne.s32.totalorder %s22, %s25
      %p31 = scmp.eq.s32.totalorder %s12, 0
      %p32 = por %p30, %p31
      %p33 = scmp.ne.s32.totalorder %s22, %s25
      %p34 = scmp.eq.s32.totalorder %s17, 1
      %p35 = por %p33, %p34
      %p36 = scmp.ne.s32.totalorder %s25, %s26
      %p37 = scmp.eq.s32.totalorder %s17, 0
      %p38 = por %p36, %p37
      %p39 = scmp.ne.s32.totalorder %s25, %s26
      %p40 = scmp.eq.s32.totalorder %s18, 1
      %p41 = por %p39, %p40
      %p43 = scmp.ne.s32.totalorder %s26, %s42
      %p44 = scmp.eq.s32.totalorder %s18, 0
      %p45 = por %p43, %p44
      %s47 = sadd.s32 %s46, 1
      %p50 = scmp.eq.s32.totalorder %s12, 1
      %p51 = scmp.ne.s32.totalorder %s46, %s48
      %p52 = scmp.eq.s32.totalorder %s12, 0
      %p53 = por %p51, %p52
      %p54 = scmp.ne.s32.totalorder %s46, %s48
      %p55 = scmp.eq.s32.totalorder %s17, 1
      %p56 = por %p54, %p55
      %p57 = scmp.ne.s32.totalorder %s48, %s49
      %p58 = scmp.eq.s32.totalorder %s17, 0
      %p59 = por %p57, %p58
      %p60 = scmp.ne.s32.totalorder %s48, %s49
      %p61 = scmp.eq.s32.totalorder %s18, 1
      %p62 = por %p60, %p61
      %p64 = scmp.ne.s32.totalorder %s49, %s63
      %p65 = scmp.eq.s32.totalorder %s18, 0
      %p66 = por %p64, %p65
      %s68 = sadd.s32 %s67, 1
      %p71 = scmp.eq.s32.totalorder %s12, 1
      %p72 = scmp.ne.s32.totalorder %s67, %s69
      %p73 = scmp.eq.s32.totalorder %s12, 0
      %p74 = por %p72, %p73
      %p75 = scmp.ne.s32.totalorder %s67, %s69
      %p76 = scmp.eq.s32.totalorder %s17, 1
      %p77 = por %p75, %p76
      %p78 = scmp.ne.s32.totalorder %s69, %s70
      %p79 = scmp.eq.s32.totalorder %s17, 0
      %p80 = por %p78, %p79
      %p81 = scmp.ne.s32.totalorder %s69, %s70
      %p82 = scmp.eq.s32.totalorder %s18, 1
      %p83 = por %p81, %p82
      %p85 = scmp.ne.s32.totalorder %s70, %s84
      %p86 = scmp.eq.s32.totalorder %s18, 0
      %p87 = por %p85, %p86
      %s88 = ssub.s32 %s12, %s19
      %p89 = scmp.eq.s32.totalorder %s88, 0
      %s91 = sadd.s32 %s90, 1
      %s92 = scalar_select %p89, %s90, %s91
      %p95 = pneg %p89
      %p96 = scmp.eq.s32.totalorder %s12, 1
      %p97 = por %p95, %p96
      %p98 = scmp.ne.s32.totalorder %s90, %s93
      %p99 = scmp.eq.s32.totalorder %s12, 0
      %p100 = por %p98, %p99
      %p101 = scmp.ne.s32.totalorder %s90, %s93
      %p102 = scmp.eq.s32.totalorder %s17, 1
      %p103 = por %p101, %p102
      %p104 = scmp.ne.s32.totalorder %s93, %s94
      %p105 = scmp.eq.s32.totalorder %s17, 0
      %p106 = por %p104, %p105
      %p107 = scmp.ne.s32.totalorder %s93, %s94
      %p108 = scmp.eq.s32.totalorder %s18, 1
      %p109 = por %p107, %p108
      %p111 = scmp.ne.s32.totalorder %s94, %s110
      %p112 = scmp.eq.s32.totalorder %s18, 0
      %p113 = por %p111, %p112
      %p114 = scmp.le.s32.totalorder 1, %s12
      %p115 = scmp.lt.s32.totalorder %s12, 3
      %p116 = pnand %p114, %p115
      %p117 = pneg %p116
      // Predicated region
      $region9: #{tpu_custom_call.1} parent=5 // pred_check
        _
      $region10: #{tpu_custom_call.1} parent=5 // pred_check_branch
        %119 = sbr.rel (%p116) target = $region12
      $region11: #{tpu_custom_call.1} parent=5 // pred_region
        %s120 = ssub.s32 %s12, 1
        // Predicated region
        $region13: #{tpu_custom_call.1} parent=11 // pred_check
          %p121 = pneg %p59
        $region14: #{tpu_custom_call.1} parent=11 // pred_check_branch
          %123 = sbr.rel (%p121) target = $region16
        $region15: #{tpu_custom_call.1} parent=11 // pred_region
          _
        $region16: #{tpu_custom_call.1} parent=11 // pred_fallthru
          _
        // Predicated region
        $region17: #{tpu_custom_call.1} parent=11 // pred_check
          %p124 = pneg %p80
        $region18: #{tpu_custom_call.1} parent=11 // pred_check_branch
          %126 = sbr.rel (%p124) target = $region20
        $region19: #{tpu_custom_call.1} parent=11 // pred_region
          _
        $region20: #{tpu_custom_call.1} parent=11 // pred_fallthru
          _
      $region12: #{tpu_custom_call.1} parent=5 // pred_fallthru
        _
      %p127 = scmp.lt.s32.totalorder %s12, 2
      // Predicated region
      $region21: #{tpu_custom_call.1} parent=5 // pred_check
        %p128 = pneg %p127
      $region22: #{tpu_custom_call.1} parent=5 // pred_check_branch
        %130 = sbr.rel (%p128) target = $region24
      $region23: #{tpu_custom_call.1} parent=5 // pred_region
        // Predicated region
        $region25: #{tpu_custom_call.1} parent=23 // pred_check
          %p131 = pneg %p32
        $region26: #{tpu_custom_call.1} parent=23 // pred_check_branch
          %133 = sbr.rel (%p131) target = $region28
        $region27: #{tpu_custom_call.1} parent=23 // pred_region
          %p134 = scmp.lt.s32.totalorder %s12, 1
          %s135 = scalar_select %p134, %s12, 1
          %s136 = smul.addr %s135, 8
          %s137 = smul.addr %s136, 8
          %s138 = scalar_lea.vmem %s0, %s137
        $region28: #{tpu_custom_call.1} parent=23 // pred_fallthru
          _
      $region24: #{tpu_custom_call.1} parent=5 // pred_fallthru
        _
      %p139 = scmp.le.s32.totalorder 1, %s12
      %p140 = scmp.lt.s32.totalorder %s12, 3
      %p141 = pnand %p139, %p140
      %p142 = pneg %p141
      // Predicated region
      $region29: #{tpu_custom_call.1} parent=5 // pred_check
        _
      $region30: #{tpu_custom_call.1} parent=5 // pred_check_branch
        %144 = sbr.rel (%p141) target = $region32
      $region31: #{tpu_custom_call.1} parent=5 // pred_region
        %s145 = ssub.s32 %s12, 1
        %p146 = scmp.lt.s32.totalorder %s17, 1
        %s147 = scalar_select %p146, %s17, 1
        %s148 = smul.addr %s147, 8
        %s149 = smul.addr %s148, 8
        %s150 = scalar_lea.vmem %s0, %s149
        %p151 = pneg %p38
        %p152 = pneg %p35
        %p153 = pneg %p59
        %p154 = pneg %p56
        %p155 = pneg %p80
        %p156 = pneg %p77
        %p157 = pneg %p106
        %p158 = pneg %p103
        %s159 = sand.u32 %s93, 1
        %s160 = scalar_lea.sflag [#allocation3], %s159
        %s161 = sand.u32 %s93, 1
        %s162 = smul.addr %s161, 24
        %s163 = scalar_lea.vmem [#allocation2], %s162
        %p164 = scmp.lt.s32.totalorder %s17, 1
        %s165 = scalar_select %p164, %s17, 1
        %s166 = smul.addr %s165, 8
        %s167 = smul.addr %s166, 8
        %s168 = scalar_lea.vmem %s0, %s167
        %v169 = vld [vmem:[%s168] sm:$0xff]
        %v170 = vld [vmem:[%s168 + $0x8] sm:$0xff]
        %v171 = vld [vmem:[%s168 + $0x10] sm:$0xff]
        %v172 = vld [vmem:[%s168 + $0x18] sm:$0xff]
        %v173 = vld [vmem:[%s168 + $0x20] sm:$0xff]
        %v174 = vld [vmem:[%s168 + $0x28] sm:$0xff]
        %v175 = vld [vmem:[%s168 + $0x30] sm:$0xff]
        %v176 = vld [vmem:[%s168 + $0x38] sm:$0xff]
        %v177 = vld [vmem:[%s1] sm:$0xff]
        %v178 = vld [vmem:[%s1 + $0x8] sm:$0xff]
        %v179 = vld [vmem:[%s1 + $0x10] sm:$0xff]
        %v180 = vld [vmem:[%s1 + $0x18] sm:$0xff]
        %v181 = vld [vmem:[%s1 + $0x20] sm:$0xff]
        %v182 = vld [vmem:[%s1 + $0x28] sm:$0xff]
        %v183 = vld [vmem:[%s1 + $0x30] sm:$0xff]
        %v184 = vld [vmem:[%s1 + $0x38] sm:$0xff]
        %v185 = vld [vmem:[%s2] sm:$0xff]
        %v186 = vld [vmem:[%s2 + $0x8] sm:$0xff]
        %v187 = vld [vmem:[%s2 + $0x10] sm:$0xff]
        %v188 = vld [vmem:[%s2 + $0x18] sm:$0xff]
        %v189 = vld [vmem:[%s2 + $0x20] sm:$0xff]
        %v190 = vld [vmem:[%s2 + $0x28] sm:$0xff]
        %v191 = vld [vmem:[%s2 + $0x30] sm:$0xff]
        %v192 = vld [vmem:[%s2 + $0x38] sm:$0xff]
        %v193 = vld [vmem:[%s2 + $0x40] sm:$0xff]
        %v194 = vld [vmem:[%s2 + $0x48] sm:$0xff]
        %v195 = vld [vmem:[%s2 + $0x50] sm:$0xff]
        %v196 = vld [vmem:[%s2 + $0x58] sm:$0xff]
        %v197 = vld [vmem:[%s2 + $0x60] sm:$0xff]
        %v198 = vld [vmem:[%s2 + $0x68] sm:$0xff]
        %v199 = vld [vmem:[%s2 + $0x70] sm:$0xff]
        %v200 = vld [vmem:[%s2 + $0x78] sm:$0xff]
        %v201 = vld [vmem:[%s2 + $0x80] sm:$0xff]
        %v202 = vld [vmem:[%s2 + $0x88] sm:$0xff]
        %v203 = vld [vmem:[%s2 + $0x90] sm:$0xff]
        %v204 = vld [vmem:[%s2 + $0x98] sm:$0xff]
        %v205 = vld [vmem:[%s2 + $0xa0] sm:$0xff]
        %v206 = vld [vmem:[%s2 + $0xa8] sm:$0xff]
        %v207 = vld [vmem:[%s2 + $0xb0] sm:$0xff]
        %v208 = vld [vmem:[%s2 + $0xb8] sm:$0xff]
        %vm209 = vcmask 130048
        %v211 = vsel %vm209, %v169, 0
        %v214 = vsel %vm209, %v170, 0
        %216 = vmatprep.subr.mxu0 0.0
        %217 = vmatpush1.msra.mxu0 0.0
        %218 = vmatprep.subr.mxu0 0.0
        %219 = vmatpush1.msra.mxu0 0.0
        %220 = vmatprep.subr.mxu0 0.0
        %221 = vmatpush1.msra.mxu0 0.0
        %222 = vmatprep.subr.mxu0 0.0
        %223 = vmatpush1.msra.mxu0 0.0
        %224 = vmatprep.subr.mxu0 0.0
        %225 = vmatpush1.msra.mxu0 0.0
        %226 = vmatprep.subr.mxu0 0.0
        %227 = vmatpush1.msra.mxu0 0.0
        %228 = vmatprep.subr.mxu0 0.0
        %229 = vmatpush1.msra.mxu0 0.0
        %230 = vmatprep.subr.mxu0 0.0
        %231 = vmatpush1.msra.mxu0 0.0
        %232 = vmatprep.subr.mxu0 0.0
        %233 = vmatpush1.msra.mxu0 0.0
        %234 = vmatprep.subr.mxu0 0.0
        %235 = vmatpush1.msra.mxu0 0.0
        %236 = vmatprep.subr.mxu0 0.0
        %237 = vmatpush1.msra.mxu0 0.0
        %238 = vmatprep.subr.mxu0 0.0
        %239 = vmatpush1.msra.mxu0 0.0
        %240 = vmatprep.subr.mxu0 0.0
        %241 = vmatpush1.msra.mxu0 0.0
        %242 = vmatprep.subr.mxu0 0.0
        %243 = vmatpush1.msra.mxu0 0.0
        %244 = vmatprep.subr.mxu0 0.0
        %245 = vmatpush1.msra.mxu0 %v178
        %246 = vmatprep.subr.mxu0 0.0
        %247 = vmatpush1.msra.mxu0 %v177
        %248 = vmatprep.subr.mxu0 0.0
        %249 = vmatpush2.msra.mxu0 0.0
        %250 = vmatprep.subr.mxu0 0.0
        %251 = vmatpush2.msra.mxu0 0.0
        %252 = vmatprep.subr.mxu0 0.0
        %253 = vmatpush2.msra.mxu0 0.0
        %254 = vmatprep.subr.mxu0 0.0
        %255 = vmatpush2.msra.mxu0 0.0
        %256 = vmatprep.subr.mxu0 0.0
        %257 = vmatpush2.msra.mxu0 0.0
        %258 = vmatprep.subr.mxu0 0.0
        %259 = vmatpush2.msra.mxu0 0.0
        %260 = vmatprep.subr.mxu0 0.0
        %261 = vmatpush2.msra.mxu0 0.0
        %262 = vmatprep.subr.mxu0 0.0
        %263 = vmatpush2.msra.mxu0 0.0
        %264 = vmatprep.subr.mxu0 0.0
        %265 = vmatpush2.msra.mxu0 0.0
        %266 = vmatprep.subr.mxu0 0.0
        %267 = vmatpush2.msra.mxu0 0.0
        %268 = vmatprep.subr.mxu0 0.0
        %269 = vmatpush2.msra.mxu0 0.0
        %270 = vmatprep.subr.mxu0 0.0
        %271 = vmatpush2.msra.mxu0 0.0
        %272 = vmatprep.subr.mxu0 0.0
        %273 = vmatpush2.msra.mxu0 0.0
        %274 = vmatprep.subr.mxu0 0.0
        %275 = vmatpush2.msra.mxu0 0.0
        %276 = vmatprep.subr.mxu0 0.0
        %277 = vmatpush2.msra.mxu0 0.0
        %278 = vmatprep.subr.mxu0 0.0
        %279 = vmatpush2.msra.mxu0 0.0
        %280 = vmatprep.mubr.f32.mxu0 0.0
        %281 = vmatmul.mubr.f32.gmra.mxu0 %v211
        %v282 = vpop.f32.mrf.mxu0
        %v283 = vadd.f32 0.0, %v282
        %v284 = vpop.f32.mrf.mxu0
        %285 = vmatprep.mubr.f32.mxu0 0.0
        %286 = vmatmul.mubr.f32.gmra.mxu0 %v214
        %v287 = vpop.f32.mrf.mxu0
        %v288 = vadd.f32 0.0, %v287
        %v289 = vpop.f32.mrf.mxu0
        %290 = vdwg.mxu0
        %v292 = vsel %vm209, %v171, 0
        %v295 = vsel %vm209, %v172, 0
        %297 = vmatprep.subr.mxu0 0.0
        %298 = vmatpush1.msra.mxu0 0.0
        %299 = vmatprep.subr.mxu0 0.0
        %300 = vmatpush1.msra.mxu0 0.0
        %301 = vmatprep.subr.mxu0 0.0
        %302 = vmatpush1.msra.mxu0 0.0
        %303 = vmatprep.subr.mxu0 0.0
        %304 = vmatpush1.msra.mxu0 0.0
        %305 = vmatprep.subr.mxu0 0.0
        %306 = vmatpush1.msra.mxu0 0.0
        %307 = vmatprep.subr.mxu0 0.0
        %308 = vmatpush1.msra.mxu0 0.0
        %309 = vmatprep.subr.mxu0 0.0
        %310 = vmatpush1.msra.mxu0 0.0
        %311 = vmatprep.subr.mxu0 0.0
        %312 = vmatpush1.msra.mxu0 0.0
        %313 = vmatprep.subr.mxu0 0.0
        %314 = vmatpush1.msra.mxu0 0.0
        %315 = vmatprep.subr.mxu0 0.0
        %316 = vmatpush1.msra.mxu0 0.0
        %317 = vmatprep.subr.mxu0 0.0
        %318 = vmatpush1.msra.mxu0 0.0
        %319 = vmatprep.subr.mxu0 0.0
        %320 = vmatpush1.msra.mxu0 0.0
        %321 = vmatprep.subr.mxu0 0.0
        %322 = vmatpush1.msra.mxu0 0.0
        %323 = vmatprep.subr.mxu0 0.0
        %324 = vmatpush1.msra.mxu0 0.0
        %325 = vmatprep.subr.mxu0 0.0
        %326 = vmatpush1.msra.mxu0 %v180
        %327 = vmatprep.subr.mxu0 0.0
        %328 = vmatpush1.msra.mxu0 %v179
        %329 = vmatprep.subr.mxu0 0.0
        %330 = vmatpush2.msra.mxu0 0.0
        %331 = vmatprep.subr.mxu0 0.0
        %332 = vmatpush2.msra.mxu0 0.0
        %333 = vmatprep.subr.mxu0 0.0
        %334 = vmatpush2.msra.mxu0 0.0
        %335 = vmatprep.subr.mxu0 0.0
        %336 = vmatpush2.msra.mxu0 0.0
        %337 = vmatprep.subr.mxu0 0.0
        %338 = vmatpush2.msra.mxu0 0.0
        %339 = vmatprep.subr.mxu0 0.0
        %340 = vmatpush2.msra.mxu0 0.0
        %341 = vmatprep.subr.mxu0 0.0
        %342 = vmatpush2.msra.mxu0 0.0
        %343 = vmatprep.subr.mxu0 0.0
        %344 = vmatpush2.msra.mxu0 0.0
        %345 = vmatprep.subr.mxu0 0.0
        %346 = vmatpush2.msra.mxu0 0.0
        %347 = vmatprep.subr.mxu0 0.0
        %348 = vmatpush2.msra.mxu0 0.0
        %349 = vmatprep.subr.mxu0 0.0
        %350 = vmatpush2.msra.mxu0 0.0
        %351 = vmatprep.subr.mxu0 0.0
        %352 = vmatpush2.msra.mxu0 0.0
        %353 = vmatprep.subr.mxu0 0.0
        %354 = vmatpush2.msra.mxu0 0.0
        %355 = vmatprep.subr.mxu0 0.0
        %356 = vmatpush2.msra.mxu0 0.0
        %357 = vmatprep.subr.mxu0 0.0
        %358 = vmatpush2.msra.mxu0 0.0
        %359 = vmatprep.subr.mxu0 0.0
        %360 = vmatpush2.msra.mxu0 0.0
        %361 = vmatprep.mubr.f32.mxu0 0.0
        %362 = vmatmul.mubr.f32.gmra.mxu0 %v292
        %v363 = vpop.f32.mrf.mxu0
        %v364 = vadd.f32 0.0, %v363
        %v365 = vpop.f32.mrf.mxu0
        %366 = vmatprep.mubr.f32.mxu0 0.0
        %367 = vmatmul.mubr.f32.gmra.mxu0 %v295
        %v368 = vpop.f32.mrf.mxu0
        %v369 = vadd.f32 0.0, %v368
        %v370 = vpop.f32.mrf.mxu0
        %371 = vdwg.mxu0
        %v373 = vsel %vm209, %v173, 0
        %v376 = vsel %vm209, %v174, 0
        %378 = vmatprep.subr.mxu0 0.0
        %379 = vmatpush1.msra.mxu0 0.0
        %380 = vmatprep.subr.mxu0 0.0
        %381 = vmatpush1.msra.mxu0 0.0
        %382 = vmatprep.subr.mxu0 0.0
        %383 = vmatpush1.msra.mxu0 0.0
        %384 = vmatprep.subr.mxu0 0.0
        %385 = vmatpush1.msra.mxu0 0.0
        %386 = vmatprep.subr.mxu0 0.0
        %387 = vmatpush1.msra.mxu0 0.0
        %388 = vmatprep.subr.mxu0 0.0
        %389 = vmatpush1.msra.mxu0 0.0
        %390 = vmatprep.subr.mxu0 0.0
        %391 = vmatpush1.msra.mxu0 0.0
        %392 = vmatprep.subr.mxu0 0.0
        %393 = vmatpush1.msra.mxu0 0.0
        %394 = vmatprep.subr.mxu0 0.0
        %395 = vmatpush1.msra.mxu0 0.0
        %396 = vmatprep.subr.mxu0 0.0
        %397 = vmatpush1.msra.mxu0 0.0
        %398 = vmatprep.subr.mxu0 0.0
        %399 = vmatpush1.msra.mxu0 0.0
        %400 = vmatprep.subr.mxu0 0.0
        %401 = vmatpush1.msra.mxu0 0.0
        %402 = vmatprep.subr.mxu0 0.0
        %403 = vmatpush1.msra.mxu0 0.0
        %404 = vmatprep.subr.mxu0 0.0
        %405 = vmatpush1.msra.mxu0 0.0
        %406 = vmatprep.subr.mxu0 0.0
        %407 = vmatpush1.msra.mxu0 %v182
        %408 = vmatprep.subr.mxu0 0.0
        %409 = vmatpush1.msra.mxu0 %v181
        %410 = vmatprep.subr.mxu0 0.0
        %411 = vmatpush2.msra.mxu0 0.0
        %412 = vmatprep.subr.mxu0 0.0
        %413 = vmatpush2.msra.mxu0 0.0
        %414 = vmatprep.subr.mxu0 0.0
        %415 = vmatpush2.msra.mxu0 0.0
        %416 = vmatprep.subr.mxu0 0.0
        %417 = vmatpush2.msra.mxu0 0.0
        %418 = vmatprep.subr.mxu0 0.0
        %419 = vmatpush2.msra.mxu0 0.0
        %420 = vmatprep.subr.mxu0 0.0
        %421 = vmatpush2.msra.mxu0 0.0
        %422 = vmatprep.subr.mxu0 0.0
        %423 = vmatpush2.msra.mxu0 0.0
        %424 = vmatprep.subr.mxu0 0.0
        %425 = vmatpush2.msra.mxu0 0.0
        %426 = vmatprep.subr.mxu0 0.0
        %427 = vmatpush2.msra.mxu0 0.0
        %428 = vmatprep.subr.mxu0 0.0
        %429 = vmatpush2.msra.mxu0 0.0
        %430 = vmatprep.subr.mxu0 0.0
        %431 = vmatpush2.msra.mxu0 0.0
        %432 = vmatprep.subr.mxu0 0.0
        %433 = vmatpush2.msra.mxu0 0.0
        %434 = vmatprep.subr.mxu0 0.0
        %435 = vmatpush2.msra.mxu0 0.0
        %436 = vmatprep.subr.mxu0 0.0
        %437 = vmatpush2.msra.mxu0 0.0
        %438 = vmatprep.subr.mxu0 0.0
        %439 = vmatpush2.msra.mxu0 0.0
        %440 = vmatprep.subr.mxu0 0.0
        %441 = vmatpush2.msra.mxu0 0.0
        %442 = vmatprep.mubr.f32.mxu0 0.0
        %443 = vmatmul.mubr.f32.gmra.mxu0 %v373
        %v444 = vpop.f32.mrf.mxu0
        %v445 = vadd.f32 0.0, %v444
        %v446 = vpop.f32.mrf.mxu0
        %447 = vmatprep.mubr.f32.mxu0 0.0
        %448 = vmatmul.mubr.f32.gmra.mxu0 %v376
        %v449 = vpop.f32.mrf.mxu0
        %v450 = vadd.f32 0.0, %v449
        %v451 = vpop.f32.mrf.mxu0
        %452 = vdwg.mxu0
        %v454 = vsel %vm209, %v175, 0
        %v457 = vsel %vm209, %v176, 0
        %459 = vmatprep.subr.mxu0 0.0
        %460 = vmatpush1.msra.mxu0 0.0
        %461 = vmatprep.subr.mxu0 0.0
        %462 = vmatpush1.msra.mxu0 0.0
        %463 = vmatprep.subr.mxu0 0.0
        %464 = vmatpush1.msra.mxu0 0.0
        %465 = vmatprep.subr.mxu0 0.0
        %466 = vmatpush1.msra.mxu0 0.0
        %467 = vmatprep.subr.mxu0 0.0
        %468 = vmatpush1.msra.mxu0 0.0
        %469 = vmatprep.subr.mxu0 0.0
        %470 = vmatpush1.msra.mxu0 0.0
        %471 = vmatprep.subr.mxu0 0.0
        %472 = vmatpush1.msra.mxu0 0.0
        %473 = vmatprep.subr.mxu0 0.0
        %474 = vmatpush1.msra.mxu0 0.0
        %475 = vmatprep.subr.mxu0 0.0
        %476 = vmatpush1.msra.mxu0 0.0
        %477 = vmatprep.subr.mxu0 0.0
        %478 = vmatpush1.msra.mxu0 0.0
        %479 = vmatprep.subr.mxu0 0.0
        %480 = vmatpush1.msra.mxu0 0.0
        %481 = vmatprep.subr.mxu0 0.0
        %482 = vmatpush1.msra.mxu0 0.0
        %483 = vmatprep.subr.mxu0 0.0
        %484 = vmatpush1.msra.mxu0 0.0
        %485 = vmatprep.subr.mxu0 0.0
        %486 = vmatpush1.msra.mxu0 0.0
        %487 = vmatprep.subr.mxu0 0.0
        %488 = vmatpush1.msra.mxu0 %v184
        %489 = vmatprep.subr.mxu0 0.0
        %490 = vmatpush1.msra.mxu0 %v183
        %491 = vmatprep.subr.mxu0 0.0
        %492 = vmatpush2.msra.mxu0 0.0
        %493 = vmatprep.subr.mxu0 0.0
        %494 = vmatpush2.msra.mxu0 0.0
        %495 = vmatprep.subr.mxu0 0.0
        %496 = vmatpush2.msra.mxu0 0.0
        %497 = vmatprep.subr.mxu0 0.0
        %498 = vmatpush2.msra.mxu0 0.0
        %499 = vmatprep.subr.mxu0 0.0
        %500 = vmatpush2.msra.mxu0 0.0
        %501 = vmatprep.subr.mxu0 0.0
        %502 = vmatpush2.msra.mxu0 0.0
        %503 = vmatprep.subr.mxu0 0.0
        %504 = vmatpush2.msra.mxu0 0.0
        %505 = vmatprep.subr.mxu0 0.0
        %506 = vmatpush2.msra.mxu0 0.0
        %507 = vmatprep.subr.mxu0 0.0
        %508 = vmatpush2.msra.mxu0 0.0
        %509 = vmatprep.subr.mxu0 0.0
        %510 = vmatpush2.msra.mxu0 0.0
        %511 = vmatprep.subr.mxu0 0.0
        %512 = vmatpush2.msra.mxu0 0.0
        %513 = vmatprep.subr.mxu0 0.0
        %514 = vmatpush2.msra.mxu0 0.0
        %515 = vmatprep.subr.mxu0 0.0
        %516 = vmatpush2.msra.mxu0 0.0
        %517 = vmatprep.subr.mxu0 0.0
        %518 = vmatpush2.msra.mxu0 0.0
        %519 = vmatprep.subr.mxu0 0.0
        %520 = vmatpush2.msra.mxu0 0.0
        %521 = vmatprep.subr.mxu0 0.0
        %522 = vmatpush2.msra.mxu0 0.0
        %523 = vmatprep.mubr.f32.mxu0 0.0
        %524 = vmatmul.mubr.f32.gmra.mxu0 %v454
        %v525 = vpop.f32.mrf.mxu0
        %v526 = vadd.f32 0.0, %v525
        %v527 = vpop.f32.mrf.mxu0
        %528 = vmatprep.mubr.f32.mxu0 0.0
        %529 = vmatmul.mubr.f32.gmra.mxu0 %v457
        %v530 = vpop.f32.mrf.mxu0
        %v531 = vadd.f32 0.0, %v530
        %v532 = vpop.f32.mrf.mxu0
        %533 = vdwg.mxu0
        %534 = vxpose.xlu0.b32.start [1/16] %v185, 128
        %535 = vxpose.xlu0.b32.cont [2/16] %v186, 128
        %536 = vxpose.xlu0.b32.cont [3/16] %v187, 128
        %537 = vxpose.xlu0.b32.cont [4/16] %v188, 128
        %538 = vxpose.xlu0.b32.cont [5/16] %v189, 128
        %539 = vxpose.xlu0.b32.cont [6/16] %v190, 128
        %540 = vxpose.xlu0.b32.cont [7/16] %v191, 128
        %541 = vxpose.xlu0.b32.cont [8/16] %v192, 128
        %542 = vxpose.xlu0.b32.cont [9/16] 0.0, 128
        %543 = vxpose.xlu0.b32.cont [10/16] 0.0, 128
        %544 = vxpose.xlu0.b32.cont [11/16] 0.0, 128
        %545 = vxpose.xlu0.b32.cont [12/16] 0.0, 128
        %546 = vxpose.xlu0.b32.cont [13/16] 0.0, 128
        %547 = vxpose.xlu0.b32.cont [14/16] 0.0, 128
        %548 = vxpose.xlu0.b32.cont [15/16] 0.0, 128
        %549 = vxpose.xlu0.b32.end [16/16] 0.0, 128
        %v550 = vpop.trf.xlu0
        %v551 = vpop.trf.xlu0
        %v552 = vpop.trf.xlu0
        %v553 = vpop.trf.xlu0
        %v554 = vpop.trf.xlu0
        %v555 = vpop.trf.xlu0
        %v556 = vpop.trf.xlu0
        %v557 = vpop.trf.xlu0
        %v558 = vpop.trf.xlu0
        %v559 = vpop.trf.xlu0
        %v560 = vpop.trf.xlu0
        %v561 = vpop.trf.xlu0
        %v562 = vpop.trf.xlu0
        %v563 = vpop.trf.xlu0
        %v564 = vpop.trf.xlu0
        %v565 = vpop.trf.xlu0
        %vm566 = vcmask 523264
        %v568 = vsel %vm566, %v550, 0
        %570 = vmatprep.subr.mxu0 0.0
        %571 = vmatpush1.msra.mxu0 0.0
        %572 = vmatprep.subr.mxu0 0.0
        %573 = vmatpush1.msra.mxu0 0.0
        %574 = vmatprep.subr.mxu0 0.0
        %575 = vmatpush1.msra.mxu0 0.0
        %576 = vmatprep.subr.mxu0 0.0
        %577 = vmatpush1.msra.mxu0 0.0
        %578 = vmatprep.subr.mxu0 0.0
        %579 = vmatpush1.msra.mxu0 0.0
        %580 = vmatprep.subr.mxu0 0.0
        %581 = vmatpush1.msra.mxu0 0.0
        %582 = vmatprep.subr.mxu0 0.0
        %583 = vmatpush1.msra.mxu0 0.0
        %584 = vmatprep.subr.mxu0 0.0
        %585 = vmatpush1.msra.mxu0 0.0
        %586 = vmatprep.subr.mxu0 0.0
        %587 = vmatpush1.msra.mxu0 %v531
        %588 = vmatprep.subr.mxu0 0.0
        %589 = vmatpush1.msra.mxu0 %v526
        %590 = vmatprep.subr.mxu0 0.0
        %591 = vmatpush1.msra.mxu0 %v450
        %592 = vmatprep.subr.mxu0 0.0
        %593 = vmatpush1.msra.mxu0 %v445
        %594 = vmatprep.subr.mxu0 0.0
        %595 = vmatpush1.msra.mxu0 %v369
        %596 = vmatprep.subr.mxu0 0.0
        %597 = vmatpush1.msra.mxu0 %v364
        %598 = vmatprep.subr.mxu0 0.0
        %599 = vmatpush1.msra.mxu0 %v288
        %600 = vmatprep.subr.mxu0 0.0
        %601 = vmatpush1.msra.mxu0 %v283
        %602 = vmatprep.subr.mxu0 0.0
        %603 = vmatpush2.msra.mxu0 0.0
        %604 = vmatprep.subr.mxu0 0.0
        %605 = vmatpush2.msra.mxu0 0.0
        %606 = vmatprep.subr.mxu0 0.0
        %607 = vmatpush2.msra.mxu0 0.0
        %608 = vmatprep.subr.mxu0 0.0
        %609 = vmatpush2.msra.mxu0 0.0
        %610 = vmatprep.subr.mxu0 0.0
        %611 = vmatpush2.msra.mxu0 0.0
        %612 = vmatprep.subr.mxu0 0.0
        %613 = vmatpush2.msra.mxu0 0.0
        %614 = vmatprep.subr.mxu0 0.0
        %615 = vmatpush2.msra.mxu0 0.0
        %616 = vmatprep.subr.mxu0 0.0
        %617 = vmatpush2.msra.mxu0 0.0
        %618 = vmatprep.subr.mxu0 0.0
        %619 = vmatpush2.msra.mxu0 0.0
        %620 = vmatprep.subr.mxu0 0.0
        %621 = vmatpush2.msra.mxu0 0.0
        %622 = vmatprep.subr.mxu0 0.0
        %623 = vmatpush2.msra.mxu0 0.0
        %624 = vmatprep.subr.mxu0 0.0
        %625 = vmatpush2.msra.mxu0 0.0
        %626 = vmatprep.subr.mxu0 0.0
        %627 = vmatpush2.msra.mxu0 0.0
        %628 = vmatprep.subr.mxu0 0.0
        %629 = vmatpush2.msra.mxu0 0.0
        %630 = vmatprep.subr.mxu0 0.0
        %631 = vmatpush2.msra.mxu0 0.0
        %632 = vmatprep.subr.mxu0 0.0
        %633 = vmatpush2.msra.mxu0 0.0
        %634 = vmatprep.mubr.f32.mxu0 0.0
        %635 = vmatmul.mubr.f32.gmra.mxu0 %v568
        %v636 = vpop.f32.mrf.mxu0
        %v637 = vadd.f32 0.0, %v636
        %v638 = vpop.f32.mrf.mxu0
        %639 = vdwg.mxu0
        %640 = vxpose.xlu0.b32.start [1/16] %v193, 128
        %641 = vxpose.xlu0.b32.cont [2/16] %v194, 128
        %642 = vxpose.xlu0.b32.cont [3/16] %v195, 128
        %643 = vxpose.xlu0.b32.cont [4/16] %v196, 128
        %644 = vxpose.xlu0.b32.cont [5/16] %v197, 128
        %645 = vxpose.xlu0.b32.cont [6/16] %v198, 128
        %646 = vxpose.xlu0.b32.cont [7/16] %v199, 128
        %647 = vxpose.xlu0.b32.cont [8/16] %v200, 128
        %648 = vxpose.xlu0.b32.cont [9/16] 0.0, 128
        %649 = vxpose.xlu0.b32.cont [10/16] 0.0, 128
        %650 = vxpose.xlu0.b32.cont [11/16] 0.0, 128
        %651 = vxpose.xlu0.b32.cont [12/16] 0.0, 128
        %652 = vxpose.xlu0.b32.cont [13/16] 0.0, 128
        %653 = vxpose.xlu0.b32.cont [14/16] 0.0, 128
        %654 = vxpose.xlu0.b32.cont [15/16] 0.0, 128
        %655 = vxpose.xlu0.b32.end [16/16] 0.0, 128
        %v656 = vpop.trf.xlu0
        %v657 = vpop.trf.xlu0
        %v658 = vpop.trf.xlu0
        %v659 = vpop.trf.xlu0
        %v660 = vpop.trf.xlu0
        %v661 = vpop.trf.xlu0
        %v662 = vpop.trf.xlu0
        %v663 = vpop.trf.xlu0
        %v664 = vpop.trf.xlu0
        %v665 = vpop.trf.xlu0
        %v666 = vpop.trf.xlu0
        %v667 = vpop.trf.xlu0
        %v668 = vpop.trf.xlu0
        %v669 = vpop.trf.xlu0
        %v670 = vpop.trf.xlu0
        %v671 = vpop.trf.xlu0
        %680 = vrot.lane.b32.xlu0 %v283, 120
        %v681 = vpop.permute.xlu0 %680
        %682 = vrot.lane.b32.xlu0 %v288, 120
        %v683 = vpop.permute.xlu0 %682
        %684 = vrot.lane.b32.xlu0 %v364, 120
        %v685 = vpop.permute.xlu0 %684
        %686 = vrot.lane.b32.xlu0 %v369, 120
        %v687 = vpop.permute.xlu0 %686
        %688 = vrot.lane.b32.xlu0 %v445, 120
        %v689 = vpop.permute.xlu0 %688
        %690 = vrot.lane.b32.xlu0 %v450, 120
        %v691 = vpop.permute.xlu0 %690
        %692 = vrot.lane.b32.xlu0 %v526, 120
        %v693 = vpop.permute.xlu0 %692
        %694 = vrot.lane.b32.xlu0 %v531, 120
        %v695 = vpop.permute.xlu0 %694
        %v705 = vsel %vm566, %v656, 0
        %707 = vmatprep.subr.mxu0 0.0
        %708 = vmatpush1.msra.mxu0 0.0
        %709 = vmatprep.subr.mxu0 0.0
        %710 = vmatpush1.msra.mxu0 0.0
        %711 = vmatprep.subr.mxu0 0.0
        %712 = vmatpush1.msra.mxu0 0.0
        %713 = vmatprep.subr.mxu0 0.0
        %714 = vmatpush1.msra.mxu0 0.0
        %715 = vmatprep.subr.mxu0 0.0
        %716 = vmatpush1.msra.mxu0 0.0
        %717 = vmatprep.subr.mxu0 0.0
        %718 = vmatpush1.msra.mxu0 0.0
        %719 = vmatprep.subr.mxu0 0.0
        %720 = vmatpush1.msra.mxu0 0.0
        %721 = vmatprep.subr.mxu0 0.0
        %722 = vmatpush1.msra.mxu0 0.0
        %723 = vmatprep.subr.mxu0 0.0
        %724 = vmatpush1.msra.mxu0 %v695
        %725 = vmatprep.subr.mxu0 0.0
        %726 = vmatpush1.msra.mxu0 %v693
        %727 = vmatprep.subr.mxu0 0.0
        %728 = vmatpush1.msra.mxu0 %v691
        %729 = vmatprep.subr.mxu0 0.0
        %730 = vmatpush1.msra.mxu0 %v689
        %731 = vmatprep.subr.mxu0 0.0
        %732 = vmatpush1.msra.mxu0 %v687
        %733 = vmatprep.subr.mxu0 0.0
        %734 = vmatpush1.msra.mxu0 %v685
        %735 = vmatprep.subr.mxu0 0.0
        %736 = vmatpush1.msra.mxu0 %v683
        %737 = vmatprep.subr.mxu0 0.0
        %738 = vmatpush1.msra.mxu0 %v681
        %739 = vmatprep.subr.mxu0 0.0
        %740 = vmatpush2.msra.mxu0 0.0
        %741 = vmatprep.subr.mxu0 0.0
        %742 = vmatpush2.msra.mxu0 0.0
        %743 = vmatprep.subr.mxu0 0.0
        %744 = vmatpush2.msra.mxu0 0.0
        %745 = vmatprep.subr.mxu0 0.0
        %746 = vmatpush2.msra.mxu0 0.0
        %747 = vmatprep.subr.mxu0 0.0
        %748 = vmatpush2.msra.mxu0 0.0
        %749 = vmatprep.subr.mxu0 0.0
        %750 = vmatpush2.msra.mxu0 0.0
        %751 = vmatprep.subr.mxu0 0.0
        %752 = vmatpush2.msra.mxu0 0.0
        %753 = vmatprep.subr.mxu0 0.0
        %754 = vmatpush2.msra.mxu0 0.0
        %755 = vmatprep.subr.mxu0 0.0
        %756 = vmatpush2.msra.mxu0 0.0
        %757 = vmatprep.subr.mxu0 0.0
        %758 = vmatpush2.msra.mxu0 0.0
        %759 = vmatprep.subr.mxu0 0.0
        %760 = vmatpush2.msra.mxu0 0.0
        %761 = vmatprep.subr.mxu0 0.0
        %762 = vmatpush2.msra.mxu0 0.0
        %763 = vmatprep.subr.mxu0 0.0
        %764 = vmatpush2.msra.mxu0 0.0
        %765 = vmatprep.subr.mxu0 0.0
        %766 = vmatpush2.msra.mxu0 0.0
        %767 = vmatprep.subr.mxu0 0.0
        %768 = vmatpush2.msra.mxu0 0.0
        %769 = vmatprep.subr.mxu0 0.0
        %770 = vmatpush2.msra.mxu0 0.0
        %771 = vmatprep.mubr.f32.mxu0 0.0
        %772 = vmatmul.mubr.f32.gmra.mxu0 %v705
        %v773 = vpop.f32.mrf.mxu0
        %v774 = vadd.f32 0.0, %v773
        %v775 = vpop.f32.mrf.mxu0
        %776 = vdwg.mxu0
        %777 = vxpose.xlu0.b32.start [1/16] %v201, 128
        %778 = vxpose.xlu0.b32.cont [2/16] %v202, 128
        %779 = vxpose.xlu0.b32.cont [3/16] %v203, 128
        %780 = vxpose.xlu0.b32.cont [4/16] %v204, 128
        %781 = vxpose.xlu0.b32.cont [5/16] %v205, 128
        %782 = vxpose.xlu0.b32.cont [6/16] %v206, 128
        %783 = vxpose.xlu0.b32.cont [7/16] %v207, 128
        %784 = vxpose.xlu0.b32.cont [8/16] %v208, 128
        %785 = vxpose.xlu0.b32.cont [9/16] 0.0, 128
        %786 = vxpose.xlu0.b32.cont [10/16] 0.0, 128
        %787 = vxpose.xlu0.b32.cont [11/16] 0.0, 128
        %788 = vxpose.xlu0.b32.cont [12/16] 0.0, 128
        %789 = vxpose.xlu0.b32.cont [13/16] 0.0, 128
        %790 = vxpose.xlu0.b32.cont [14/16] 0.0, 128
        %791 = vxpose.xlu0.b32.cont [15/16] 0.0, 128
        %792 = vxpose.xlu0.b32.end [16/16] 0.0, 128
        %v793 = vpop.trf.xlu0
        %v794 = vpop.trf.xlu0
        %v795 = vpop.trf.xlu0
        %v796 = vpop.trf.xlu0
        %v797 = vpop.trf.xlu0
        %v798 = vpop.trf.xlu0
        %v799 = vpop.trf.xlu0
        %v800 = vpop.trf.xlu0
        %v801 = vpop.trf.xlu0
        %v802 = vpop.trf.xlu0
        %v803 = vpop.trf.xlu0
        %v804 = vpop.trf.xlu0
        %v805 = vpop.trf.xlu0
        %v806 = vpop.trf.xlu0
        %v807 = vpop.trf.xlu0
        %v808 = vpop.trf.xlu0
        %809 = vrot.lane.b32.xlu0 %v283, 112
        %v810 = vpop.permute.xlu0 %809
        %811 = vrot.lane.b32.xlu0 %v288, 112
        %v812 = vpop.permute.xlu0 %811
        %813 = vrot.lane.b32.xlu0 %v364, 112
        %v814 = vpop.permute.xlu0 %813
        %815 = vrot.lane.b32.xlu0 %v369, 112
        %v816 = vpop.permute.xlu0 %815
        %817 = vrot.lane.b32.xlu0 %v445, 112
        %v818 = vpop.permute.xlu0 %817
        %819 = vrot.lane.b32.xlu0 %v450, 112
        %v820 = vpop.permute.xlu0 %819
        %821 = vrot.lane.b32.xlu0 %v526, 112
        %v822 = vpop.permute.xlu0 %821
        %823 = vrot.lane.b32.xlu0 %v531, 112
        %v824 = vpop.permute.xlu0 %823
        %v834 = vsel %vm566, %v793, 0
        %836 = vmatprep.subr.mxu0 0.0
        %837 = vmatpush1.msra.mxu0 0.0
        %838 = vmatprep.subr.mxu0 0.0
        %839 = vmatpush1.msra.mxu0 0.0
        %840 = vmatprep.subr.mxu0 0.0
        %841 = vmatpush1.msra.mxu0 0.0
        %842 = vmatprep.subr.mxu0 0.0
        %843 = vmatpush1.msra.mxu0 0.0
        %844 = vmatprep.subr.mxu0 0.0
        %845 = vmatpush1.msra.mxu0 0.0
        %846 = vmatprep.subr.mxu0 0.0
        %847 = vmatpush1.msra.mxu0 0.0
        %848 = vmatprep.subr.mxu0 0.0
        %849 = vmatpush1.msra.mxu0 0.0
        %850 = vmatprep.subr.mxu0 0.0
        %851 = vmatpush1.msra.mxu0 0.0
        %852 = vmatprep.subr.mxu0 0.0
        %853 = vmatpush1.msra.mxu0 %v824
        %854 = vmatprep.subr.mxu0 0.0
        %855 = vmatpush1.msra.mxu0 %v822
        %856 = vmatprep.subr.mxu0 0.0
        %857 = vmatpush1.msra.mxu0 %v820
        %858 = vmatprep.subr.mxu0 0.0
        %859 = vmatpush1.msra.mxu0 %v818
        %860 = vmatprep.subr.mxu0 0.0
        %861 = vmatpush1.msra.mxu0 %v816
        %862 = vmatprep.subr.mxu0 0.0
        %863 = vmatpush1.msra.mxu0 %v814
        %864 = vmatprep.subr.mxu0 0.0
        %865 = vmatpush1.msra.mxu0 %v812
        %866 = vmatprep.subr.mxu0 0.0
        %867 = vmatpush1.msra.mxu0 %v810
        %868 = vmatprep.subr.mxu0 0.0
        %869 = vmatpush2.msra.mxu0 0.0
        %870 = vmatprep.subr.mxu0 0.0
        %871 = vmatpush2.msra.mxu0 0.0
        %872 = vmatprep.subr.mxu0 0.0
        %873 = vmatpush2.msra.mxu0 0.0
        %874 = vmatprep.subr.mxu0 0.0
        %875 = vmatpush2.msra.mxu0 0.0
        %876 = vmatprep.subr.mxu0 0.0
        %877 = vmatpush2.msra.mxu0 0.0
        %878 = vmatprep.subr.mxu0 0.0
        %879 = vmatpush2.msra.mxu0 0.0
        %880 = vmatprep.subr.mxu0 0.0
        %881 = vmatpush2.msra.mxu0 0.0
        %882 = vmatprep.subr.mxu0 0.0
        %883 = vmatpush2.msra.mxu0 0.0
        %884 = vmatprep.subr.mxu0 0.0
        %885 = vmatpush2.msra.mxu0 0.0
        %886 = vmatprep.subr.mxu0 0.0
        %887 = vmatpush2.msra.mxu0 0.0
        %888 = vmatprep.subr.mxu0 0.0
        %889 = vmatpush2.msra.mxu0 0.0
        %890 = vmatprep.subr.mxu0 0.0
        %891 = vmatpush2.msra.mxu0 0.0
        %892 = vmatprep.subr.mxu0 0.0
        %893 = vmatpush2.msra.mxu0 0.0
        %894 = vmatprep.subr.mxu0 0.0
        %895 = vmatpush2.msra.mxu0 0.0
        %896 = vmatprep.subr.mxu0 0.0
        %897 = vmatpush2.msra.mxu0 0.0
        %898 = vmatprep.subr.mxu0 0.0
        %899 = vmatpush2.msra.mxu0 0.0
        %900 = vmatprep.mubr.f32.mxu0 0.0
        %901 = vmatmul.mubr.f32.gmra.mxu0 %v834
        %v902 = vpop.f32.mrf.mxu0
        %v903 = vadd.f32 0.0, %v902
        %v904 = vpop.f32.mrf.mxu0
        %905 = vdwg.mxu0
        %vm906 = vcmask 64512
        %907 = vst.msk [vmem:[%s163] sm:$0xff] %vm906, %v637
        %908 = vst.msk [vmem:[%s163 + $0x8] sm:$0xff] %vm906, %v774
        %909 = vst.msk [vmem:[%s163 + $0x10] sm:$0xff] %vm906, %v903
        %s910 = sand.u32 %s93, 1
        %s911 = scalar_lea.sflag [#allocation3], %s910
        %s912 = sand.u32 %s93, 1
        %s913 = smul.addr %s912, 24
        %s914 = scalar_lea.vmem [#allocation2], %s913
        // Predicated region
        $region33: #{tpu_custom_call.1} parent=31 // pred_check
          %p915 = pneg %p103
        $region34: #{tpu_custom_call.1} parent=31 // pred_check_branch
          %917 = sbr.rel (%p915) target = $region36
        $region35: #{tpu_custom_call.1} parent=31 // pred_region
          %s919 = ssub.s32 384, 384
          %920 = vsyncadd %s911, %s919
          %s921 = smul.addr %s17, 3
          %s922 = smul.addr %s921, 128
          %s923 = scalar_lea.hbm %s3, %s922
          %s924 = sshll.u32 %s914, 4
          %s925 = int_to_ptr.vmem [resolvable:$true] %s924
          %930 = dma.vmem_to_hbm [thread:$0]  %s925, 384, %s923, %s911, 128, 128, 8
        $region36: #{tpu_custom_call.1} parent=31 // pred_fallthru
          _
      $region32: #{tpu_custom_call.1} parent=5 // pred_fallthru
        _
      %p931 = scmp.le.s32.totalorder 2, %s12
      // Predicated region
      $region37: #{tpu_custom_call.1} parent=5 // pred_check
        %p932 = pneg %p931
      $region38: #{tpu_custom_call.1} parent=5 // pred_check_branch
        %934 = sbr.rel (%p932) target = $region40
      $region39: #{tpu_custom_call.1} parent=5 // pred_region
        %s935 = ssub.s32 %s12, 2
        // Predicated region
        $region41: #{tpu_custom_call.1} parent=39 // pred_check
          %p936 = pneg %p109
        $region42: #{tpu_custom_call.1} parent=39 // pred_check_branch
          %938 = sbr.rel (%p936) target = $region44
        $region43: #{tpu_custom_call.1} parent=39 // pred_region
          %s939 = sand.u32 %s94, 1
          %s940 = scalar_lea.sflag [#allocation3], %s939
          %s941 = sand.u32 %s94, 1
          %s942 = smul.addr %s941, 24
          %s943 = scalar_lea.vmem [#allocation2], %s942
          %944 = dma.done %s940, 384
        $region44: #{tpu_custom_call.1} parent=39 // pred_fallthru
          _
      $region40: #{tpu_custom_call.1} parent=5 // pred_fallthru
        _
    $region6: #{tpu_custom_call.1} parent=1 // loop_footer
      %s16 = sadd.s32 1, %s12
    $region7: #{tpu_custom_call.1} parent=1 // loop_footer_branch
      %11 = sbr.rel target = $region3
    $region8: #{tpu_custom_call.1} parent=1 // loop_exit
      _
    %945 = vsyncpa [#allocation3], 1
    %s946 = scalar_lea.sflag [#allocation3], 1
    %947 = vsyncpa %s946, 1

</llo_original>
